<compile_context>
chip_gen: v6e
topology: v6e:2x2x1
jax: 0.10.0
libtpu: 0.0.40
codegen_flags: <defaults>
</compile_context>

<pallas_src>
import functools

import jax
import jax.numpy as jnp
from jax.experimental import pallas as pl
from jax.experimental.pallas import tpu as pltpu

_LANE = 128
_BF16_SUBLANE = 16  # bf16 packs 16 rows per sublane tile


def _round_up(n, m):
    return ((n + m - 1) // m) * m


def _fused_mlp_kernel(*refs, num_layers):
    """Entire MLP for one batch tile; all weights + activations stay in VMEM.

    refs = (x_ref, w0_ref, b0_ref, ..., w{L-1}_ref, b{L-1}_ref, o_ref)
    Weights are pre-transposed to [in, out] and bf16; every matmul runs bf16xbf16
    on the MXU with f32 accumulation.  ReLU after every layer but the last.
    """
    x_ref = refs[0]
    o_ref = refs[-1]
    wb = refs[1:-1]

    h = x_ref[...].astype(jnp.float32)
    for i in range(num_layers):
        w = wb[2 * i][...]                           # [Din_p, Dout_p] bf16
        b = wb[2 * i + 1][...].astype(jnp.float32)   # [1, Dout_p]  (f32 add)
        h = jnp.dot(h.astype(jnp.bfloat16), w,
                    preferred_element_type=jnp.float32) + b
        if i < num_layers - 1:
            h = jnp.maximum(h, 0.0)
        # TODO(synk): dropout with p>0 (training-mode Bernoulli masking via
        # pltpu.prng_seed/prng_random_bits) not implemented; dropout_rate=0.0 here.
    o_ref[...] = h.astype(o_ref.dtype)


def init_params(key, layer_dims):
    """PyTorch nn.Linear-style init: W [out, in], b [out], uniform(+/- 1/sqrt(fan_in))."""
    params = []
    for i in range(len(layer_dims) - 1):
        key, kw, kb = jax.random.split(key, 3)
        fan_in = layer_dims[i]
        bound = 1.0 / float(fan_in ** 0.5)
        w = jax.random.uniform(kw, (layer_dims[i + 1], layer_dims[i]),
                               jnp.float32, -bound, bound)
        b = jax.random.uniform(kb, (layer_dims[i + 1],), jnp.float32, -bound, bound)
        params.append((w, b))
    return params


def prepare_params(params):
    """One-time transform (no per-call transposes/pads):
      * transpose W to [in, out],
      * zero-pad *interior* feature dims to multiples of 128 (lane-dense matmuls);
        first layer's input dim and last layer's output dim stay natural-sized,
      * cast to bf16 (MXU-native operand dtype).  Zero padding stays exactly zero,
        so results are exact."""
    num_layers = len(params)
    prepared = []
    for idx, (w, b) in enumerate(params):
        dout, din = w.shape
        din_p = din if idx == 0 else _round_up(din, _LANE)
        dout_p = dout if idx == num_layers - 1 else _round_up(dout, _LANE)
        w_t = jnp.zeros((din_p, dout_p), jnp.float32).at[:din, :dout].set(jnp.transpose(w))
        b_p = jnp.zeros((1, dout_p), jnp.float32).at[0, :dout].set(b)
        prepared.append((w_t.astype(jnp.bfloat16), b_p.astype(jnp.bfloat16)))
    return prepared


def feed_forward_nn(x, prepared_params, *, block_batch=256):
    """Forward pass matching FeedForwardNN.forward as one fused pallas_call."""
    B, Din = x.shape
    assert Din == prepared_params[0][0].shape[0]
    Dout = prepared_params[-1][0].shape[1]

    # Batch padded only to a multiple of 16 (bf16 sublane packing); feature dims
    # need no runtime padding.
    B_p = _round_up(B, _BF16_SUBLANE)
    tb = min(block_batch, B_p)
    while B_p % tb:
        tb //= 2
    grid = (B_p // tb,)

    x_in = x if B_p == B else jnp.zeros((B_p, Din), x.dtype).at[:B].set(x)

    num_layers = len(prepared_params)
    flat_wb = []
    in_specs = [pl.BlockSpec((tb, Din), lambda i: (i, 0))]
    weight_bytes = 0
    for w_t, b_p in prepared_params:
        flat_wb += [w_t, b_p]
        # Grid-invariant index_map: weights/biases are fetched once and stay
        # VMEM-resident across all batch tiles.
        in_specs.append(pl.BlockSpec(w_t.shape, lambda i: (0, 0)))
        in_specs.append(pl.BlockSpec(b_p.shape, lambda i: (0, 0)))
        weight_bytes += (w_t.size * w_t.dtype.itemsize
                         + b_p.size * b_p.dtype.itemsize)

    # VMEM guard: fully-resident weights must fit (v7x has only 64 MiB / TC,
    # ~32 MiB scoped default).  Streaming a big layer over a K/N grid axis with a
    # pl.when-initialized accumulator is the fallback, not implemented here.
    if 2 * weight_bytes > 40 * 1024 * 1024:
        raise NotImplementedError(
            "weight set too large to keep fully VMEM-resident; stream the large "
            "layer over a K/N grid axis instead of the fused-resident kernel")

    flops = 2 * B_p * sum(w.shape[0] * w.shape[1] for w, _ in prepared_params)
    bytes_accessed = (x_in.size * x_in.dtype.itemsize + weight_bytes
                      + B_p * Dout * x.dtype.itemsize)

    kernel = functools.partial(_fused_mlp_kernel, num_layers=num_layers)
    out = pl.pallas_call(
        kernel,
        out_shape=jax.ShapeDtypeStruct((B_p, Dout), x.dtype),
        grid=grid,
        in_specs=in_specs,
        out_specs=pl.BlockSpec((tb, Dout), lambda i: (i, 0)),
        compiler_params=pltpu.CompilerParams(
            # batch tiles are independent -> megacore-shardable on v7x
            dimension_semantics=("parallel",)),
        cost_estimate=pl.CostEstimate(
            flops=flops, bytes_accessed=bytes_accessed, transcendentals=0),
    )(x_in, *flat_wb)

    return out if B_p == B else out[:B]


if __name__ == "__main__":
    layer_dims = [16, 32, 32, 8]   # input -> 1 hidden -> output
    batch = 512                    # multiple of the 256 batch tile -> grid=(2,), no pad copy

    key = jax.random.PRNGKey(0)
    key_x, key_p = jax.random.split(key)
    x = jax.random.normal(key_x, (batch, layer_dims[0]), jnp.float32)
    params = init_params(key_p, layer_dims)

    prepared = prepare_params(params)              # one-time transpose + pad + bf16 cast

    fwd = jax.jit(feed_forward_nn)
    out = jax.block_until_ready(fwd(x, prepared))

    # Reference with the same bf16 operands + f32 accumulation (matches the kernel's math).
    ref = x
    for i, (w, b) in enumerate(params):
        ref = jnp.dot(ref.astype(jnp.bfloat16), jnp.transpose(w).astype(jnp.bfloat16),
                      preferred_element_type=jnp.float32)
        ref = ref + b.astype(jnp.bfloat16).astype(jnp.float32)
        if i < len(params) - 1:
            ref = jnp.maximum(ref, 0.0)

    assert out.shape == (batch, layer_dims[-1])
    assert jnp.allclose(out, ref, atol=1e-2, rtol=1e-2), \
        float(jnp.max(jnp.abs(out - ref)))

    print("KERNEL_OK")
</pallas_src>

<mosaic_0001>
module attributes {stable_mosaic.version = 11 : i64} {
  func.func @_fused_mlp_kernel(%arg0: i32, %arg1: memref<256x16xf32, #tpu.memory_space<vmem>>, %arg2: memref<16x128xbf16, #tpu.memory_space<vmem>>, %arg3: memref<1x128xbf16, #tpu.memory_space<vmem>>, %arg4: memref<128x128xbf16, #tpu.memory_space<vmem>>, %arg5: memref<1x128xbf16, #tpu.memory_space<vmem>>, %arg6: memref<128x8xbf16, #tpu.memory_space<vmem>>, %arg7: memref<1x8xbf16, #tpu.memory_space<vmem>>, %arg8: memref<256x8xf32, #tpu.memory_space<vmem>>) attributes {dimension_semantics = [#tpu.dimension_semantics<parallel>], iteration_bounds = array<i64: 2>, scalar_prefetch = 0 : i64, scratch_operands = 0 : i64, tpu.core_type = #tpu.core_type<tc>, window_params = [{transform_indices = @transform_0, window_bounds = array<i64: 256, 16>}, {pipeline_mode = #tpu.pipeline_mode<synchronous>, transform_indices = @transform_1, window_bounds = array<i64: 16, 128>}, {pipeline_mode = #tpu.pipeline_mode<synchronous>, transform_indices = @transform_2, window_bounds = array<i64: 1, 128>}, {pipeline_mode = #tpu.pipeline_mode<synchronous>, transform_indices = @transform_3, window_bounds = array<i64: 128, 128>}, {pipeline_mode = #tpu.pipeline_mode<synchronous>, transform_indices = @transform_4, window_bounds = array<i64: 1, 128>}, {pipeline_mode = #tpu.pipeline_mode<synchronous>, transform_indices = @transform_5, window_bounds = array<i64: 128, 8>}, {pipeline_mode = #tpu.pipeline_mode<synchronous>, transform_indices = @transform_6, window_bounds = array<i64: 1, 8>}, {transform_indices = @transform_7, window_bounds = array<i64: 256, 8>}]} {
    %c0 = arith.constant 0 : index
    %c0_0 = arith.constant 0 : index
    %0 = vector.load %arg1[%c0, %c0_0] : memref<256x16xf32, #tpu.memory_space<vmem>>, vector<256x16xf32>
    %c0_1 = arith.constant 0 : index
    %c0_2 = arith.constant 0 : index
    %1 = vector.load %arg2[%c0_1, %c0_2] : memref<16x128xbf16, #tpu.memory_space<vmem>>, vector<16x128xbf16>
    %c0_3 = arith.constant 0 : index
    %c0_4 = arith.constant 0 : index
    %2 = vector.load %arg3[%c0_3, %c0_4] : memref<1x128xbf16, #tpu.memory_space<vmem>>, vector<1x128xbf16>
    %3 = arith.extf %2 : vector<1x128xbf16> to vector<1x128xf32>
    %4 = arith.truncf %0 : vector<256x16xf32> to vector<256x16xbf16>
    %cst = arith.constant dense<0.000000e+00> : vector<256x128xf32>
    %5 = tpu.matmul %4, %1, %cst {dimension_numbers = #tpu.dot_dimension_numbers<[1], [0], [0], [1], [0, 0, 1, 1], [], []>} : vector<256x16xbf16>, vector<16x128xbf16>, vector<256x128xf32> -> vector<256x128xf32>
    %6 = vector.broadcast %3 : vector<1x128xf32> to vector<256x128xf32>
    %7 = arith.addf %5, %6 : vector<256x128xf32>
    %cst_5 = arith.constant 0.000000e+00 : f32
    %8 = vector.broadcast %cst_5 : f32 to vector<256x128xf32>
    %9 = arith.maximumf %7, %8 : vector<256x128xf32>
    %c0_6 = arith.constant 0 : index
    %c0_7 = arith.constant 0 : index
    %10 = vector.load %arg4[%c0_6, %c0_7] : memref<128x128xbf16, #tpu.memory_space<vmem>>, vector<128x128xbf16>
    %c0_8 = arith.constant 0 : index
    %c0_9 = arith.constant 0 : index
    %11 = vector.load %arg5[%c0_8, %c0_9] : memref<1x128xbf16, #tpu.memory_space<vmem>>, vector<1x128xbf16>
    %12 = arith.extf %11 : vector<1x128xbf16> to vector<1x128xf32>
    %13 = arith.truncf %9 : vector<256x128xf32> to vector<256x128xbf16>
    %cst_10 = arith.constant dense<0.000000e+00> : vector<256x128xf32>
    %14 = tpu.matmul %13, %10, %cst_10 {dimension_numbers = #tpu.dot_dimension_numbers<[1], [0], [0], [1], [0, 0, 1, 1], [], []>} : vector<256x128xbf16>, vector<128x128xbf16>, vector<256x128xf32> -> vector<256x128xf32>
    %15 = vector.broadcast %12 : vector<1x128xf32> to vector<256x128xf32>
    %16 = arith.addf %14, %15 : vector<256x128xf32>
    %cst_11 = arith.constant 0.000000e+00 : f32
    %17 = vector.broadcast %cst_11 : f32 to vector<256x128xf32>
    %18 = arith.maximumf %16, %17 : vector<256x128xf32>
    %c0_12 = arith.constant 0 : index
    %c0_13 = arith.constant 0 : index
    %19 = vector.load %arg6[%c0_12, %c0_13] : memref<128x8xbf16, #tpu.memory_space<vmem>>, vector<128x8xbf16>
    %c0_14 = arith.constant 0 : index
    %c0_15 = arith.constant 0 : index
    %20 = vector.load %arg7[%c0_14, %c0_15] : memref<1x8xbf16, #tpu.memory_space<vmem>>, vector<1x8xbf16>
    %21 = arith.extf %20 : vector<1x8xbf16> to vector<1x8xf32>
    %22 = arith.truncf %18 : vector<256x128xf32> to vector<256x128xbf16>
    %cst_16 = arith.constant dense<0.000000e+00> : vector<256x8xf32>
    %23 = tpu.matmul %22, %19, %cst_16 {dimension_numbers = #tpu.dot_dimension_numbers<[1], [0], [0], [1], [0, 0, 1, 1], [], []>} : vector<256x128xbf16>, vector<128x8xbf16>, vector<256x8xf32> -> vector<256x8xf32>
    %24 = vector.broadcast %21 : vector<1x8xf32> to vector<256x8xf32>
    %25 = arith.addf %23, %24 : vector<256x8xf32>
    %c0_17 = arith.constant 0 : index
    %c0_18 = arith.constant 0 : index
    %26 = vector.load %arg8[%c0_17, %c0_18] : memref<256x8xf32, #tpu.memory_space<vmem>>, vector<256x8xf32>
    tpu.vector_store %arg8[%c0_17, %c0_18], %25 {strides = array<i32>} : memref<256x8xf32, #tpu.memory_space<vmem>>, vector<256x8xf32>,
    return
  }
  func.func @transform_0(%arg0: i32) -> (i32, i32) {
    %c0_i32 = arith.constant 0 : i32
    %c0_i32_0 = arith.constant 0 : i32
    return %arg0, %c0_i32 : i32, i32
  }
  func.func @transform_1(%arg0: i32) -> (i32, i32) {
    %c0_i32 = arith.constant 0 : i32
    %c0_i32_0 = arith.constant 0 : i32
    %c0_i32_1 = arith.constant 0 : i32
    return %c0_i32, %c0_i32_0 : i32, i32
  }
  func.func @transform_2(%arg0: i32) -> (i32, i32) {
    %c0_i32 = arith.constant 0 : i32
    %c0_i32_0 = arith.constant 0 : i32
    %c0_i32_1 = arith.constant 0 : i32
    return %c0_i32, %c0_i32_0 : i32, i32
  }
  func.func @transform_3(%arg0: i32) -> (i32, i32) {
    %c0_i32 = arith.constant 0 : i32
    %c0_i32_0 = arith.constant 0 : i32
    %c0_i32_1 = arith.constant 0 : i32
    return %c0_i32, %c0_i32_0 : i32, i32
  }
  func.func @transform_4(%arg0: i32) -> (i32, i32) {
    %c0_i32 = arith.constant 0 : i32
    %c0_i32_0 = arith.constant 0 : i32
    %c0_i32_1 = arith.constant 0 : i32
    return %c0_i32, %c0_i32_0 : i32, i32
  }
  func.func @transform_5(%arg0: i32) -> (i32, i32) {
    %c0_i32 = arith.constant 0 : i32
    %c0_i32_0 = arith.constant 0 : i32
    %c0_i32_1 = arith.constant 0 : i32
    return %c0_i32, %c0_i32_0 : i32, i32
  }
  func.func @transform_6(%arg0: i32) -> (i32, i32) {
    %c0_i32 = arith.constant 0 : i32
    %c0_i32_0 = arith.constant 0 : i32
    %c0_i32_1 = arith.constant 0 : i32
    return %c0_i32, %c0_i32_0 : i32, i32
  }
  func.func @transform_7(%arg0: i32) -> (i32, i32) {
    %c0_i32 = arith.constant 0 : i32
    %c0_i32_0 = arith.constant 0 : i32
    return %arg0, %c0_i32 : i32, i32
  }
}

</mosaic_0001>

<llo_original>
// kernel: feed_forward_nn.1
$region0: #{feed_forward_nn.1}
  #allocation0 [shape = 'u32[]', space=smem, size = 0x4, offset = 0x4, fixed_abs, tag = 'smem constant byte address 0x4 - core index']
  #allocation1 [shape = 'u32[144,128]{1,0:T(1,128)}', space=vmem, size = 0x12000, scoped, tag = 'internal scratch']
  %s0 = inlined_call_operand.vmem [shape: f32[512,16], index: 0, kind: input, shape index: {}]
  %s1 = inlined_call_operand.vmem [shape: bf16[16,128], index: 1, kind: input, shape index: {}]
  %s2 = inlined_call_operand.vmem [shape: bf16[1,128], index: 2, kind: input, shape index: {}]
  %s3 = inlined_call_operand.vmem [shape: bf16[128,128], index: 3, kind: input, shape index: {}]
  %s4 = inlined_call_operand.vmem [shape: bf16[1,128], index: 4, kind: input, shape index: {}]
  %s5 = inlined_call_operand.vmem [shape: bf16[128,8], index: 5, kind: input, shape index: {}]
  %s6 = inlined_call_operand.vmem [shape: bf16[1,8], index: 6, kind: input, shape index: {}]
  %s7 = inlined_call_operand.vmem [shape: f32[512,8], index: 7, kind: output, shape index: {}]
  %s8 = sld [smem:[#allocation0]]
  $region61: #{feed_forward_nn.1} parent=0
    _
  %s10 = ssub.s32 1, %s8
  %s11 = scalar_select 0, %s10, %s8
  loop: start=0, step=1, limit=4
  $region2: #{feed_forward_nn.1} parent=0 // loop_pre_header
    _
  $region3: #{feed_forward_nn.1} parent=0 // loop_header
    %s13 = sphi 0, %s17
    %p14 = scmp.ge.s32.totalorder %s13, 4
    %s23 = sphi 0, %s25
    %s26 = sphi 0, %s23
    %s27 = sphi 0, %s26
    %s43 = sphi 0, %s27
    %s47 = sphi 0, %s47
    %s49 = sphi 0, %s47
    %s50 = sphi 0, %s49
    %s64 = sphi 0, %s50
    %s68 = sphi 0, %s68
    %s70 = sphi 0, %s68
    %s71 = sphi 0, %s70
    %s85 = sphi 0, %s71
    %s89 = sphi 0, %s89
    %s91 = sphi 0, %s89
    %s92 = sphi 0, %s91
    %s106 = sphi 0, %s92
    %s110 = sphi 0, %s110
    %s112 = sphi 0, %s110
    %s113 = sphi 0, %s112
    %s127 = sphi 0, %s113
    %s131 = sphi 0, %s131
    %s133 = sphi 0, %s131
    %s134 = sphi 0, %s133
    %s148 = sphi 0, %s134
    %s152 = sphi 0, %s152
    %s154 = sphi 0, %s152
    %s155 = sphi 0, %s154
    %s169 = sphi 0, %s155
    %s175 = sphi 0, %s177
    %s178 = sphi 0, %s175
    %s179 = sphi 0, %s178
    %s195 = sphi 0, %s179
  $region4: #{feed_forward_nn.1} parent=0 // loop_header_branch
    %16 = sbr.rel (%p14) target = $region8
  $region5: #{feed_forward_nn.1} parent=0 // loop_body
    %s18 = ssub.s32 %s13, 1
    %s19 = ssub.s32 %s13, 2
    %s20 = sadd.s32 %s13, 1
    %s21 = ssub.s32 %s13, %s20
    %p22 = scmp.eq.s32.totalorder %s21, 0
    %s24 = sadd.s32 %s23, 1
    %s25 = scalar_select %p22, %s23, %s24
    %p28 = pneg %p22
    %p29 = scmp.eq.s32.totalorder %s13, 1
    %p30 = por %p28, %p29
    %p31 = scmp.ne.s32.totalorder %s23, %s26
    %p32 = scmp.eq.s32.totalorder %s13, 0
    %p33 = por %p31, %p32
    %p34 = scmp.ne.s32.totalorder %s23, %s26
    %p35 = scmp.eq.s32.totalorder %s18, 1
    %p36 = por %p34, %p35
    %p37 = scmp.ne.s32.totalorder %s26, %s27
    %p38 = scmp.eq.s32.totalorder %s18, 0
    %p39 = por %p37, %p38
    %p40 = scmp.ne.s32.totalorder %s26, %s27
    %p41 = scmp.eq.s32.totalorder %s19, 1
    %p42 = por %p40, %p41
    %p44 = scmp.ne.s32.totalorder %s27, %s43
    %p45 = scmp.eq.s32.totalorder %s19, 0
    %p46 = por %p44, %p45
    %s48 = sadd.s32 %s47, 1
    %p51 = scmp.eq.s32.totalorder %s13, 1
    %p52 = scmp.ne.s32.totalorder %s47, %s49
    %p53 = scmp.eq.s32.totalorder %s13, 0
    %p54 = por %p52, %p53
    %p55 = scmp.ne.s32.totalorder %s47, %s49
    %p56 = scmp.eq.s32.totalorder %s18, 1
    %p57 = por %p55, %p56
    %p58 = scmp.ne.s32.totalorder %s49, %s50
    %p59 = scmp.eq.s32.totalorder %s18, 0
    %p60 = por %p58, %p59
    %p61 = scmp.ne.s32.totalorder %s49, %s50
    %p62 = scmp.eq.s32.totalorder %s19, 1
    %p63 = por %p61, %p62
    %p65 = scmp.ne.s32.totalorder %s50, %s64
    %p66 = scmp.eq.s32.totalorder %s19, 0
    %p67 = por %p65, %p66
    %s69 = sadd.s32 %s68, 1
    %p72 = scmp.eq.s32.totalorder %s13, 1
    %p73 = scmp.ne.s32.totalorder %s68, %s70
    %p74 = scmp.eq.s32.totalorder %s13, 0
    %p75 = por %p73, %p74
    %p76 = scmp.ne.s32.totalorder %s68, %s70
    %p77 = scmp.eq.s32.totalorder %s18, 1
    %p78 = por %p76, %p77
    %p79 = scmp.ne.s32.totalorder %s70, %s71
    %p80 = scmp.eq.s32.totalorder %s18, 0
    %p81 = por %p79, %p80
    %p82 = scmp.ne.s32.totalorder %s70, %s71
    %p83 = scmp.eq.s32.totalorder %s19, 1
    %p84 = por %p82, %p83
    %p86 = scmp.ne.s32.totalorder %s71, %s85
    %p87 = scmp.eq.s32.totalorder %s19, 0
    %p88 = por %p86, %p87
    %s90 = sadd.s32 %s89, 1
    %p93 = scmp.eq.s32.totalorder %s13, 1
    %p94 = scmp.ne.s32.totalorder %s89, %s91
    %p95 = scmp.eq.s32.totalorder %s13, 0
    %p96 = por %p94, %p95
    %p97 = scmp.ne.s32.totalorder %s89, %s91
    %p98 = scmp.eq.s32.totalorder %s18, 1
    %p99 = por %p97, %p98
    %p100 = scmp.ne.s32.totalorder %s91, %s92
    %p101 = scmp.eq.s32.totalorder %s18, 0
    %p102 = por %p100, %p101
    %p103 = scmp.ne.s32.totalorder %s91, %s92
    %p104 = scmp.eq.s32.totalorder %s19, 1
    %p105 = por %p103, %p104
    %p107 = scmp.ne.s32.totalorder %s92, %s106
    %p108 = scmp.eq.s32.totalorder %s19, 0
    %p109 = por %p107, %p108
    %s111 = sadd.s32 %s110, 1
    %p114 = scmp.eq.s32.totalorder %s13, 1
    %p115 = scmp.ne.s32.totalorder %s110, %s112
    %p116 = scmp.eq.s32.totalorder %s13, 0
    %p117 = por %p115, %p116
    %p118 = scmp.ne.s32.totalorder %s110, %s112
    %p119 = scmp.eq.s32.totalorder %s18, 1
    %p120 = por %p118, %p119
    %p121 = scmp.ne.s32.totalorder %s112, %s113
    %p122 = scmp.eq.s32.totalorder %s18, 0
    %p123 = por %p121, %p122
    %p124 = scmp.ne.s32.totalorder %s112, %s113
    %p125 = scmp.eq.s32.totalorder %s19, 1
    %p126 = por %p124, %p125
    %p128 = scmp.ne.s32.totalorder %s113, %s127
    %p129 = scmp.eq.s32.totalorder %s19, 0
    %p130 = por %p128, %p129
    %s132 = sadd.s32 %s131, 1
    %p135 = scmp.eq.s32.totalorder %s13, 1
    %p136 = scmp.ne.s32.totalorder %s131, %s133
    %p137 = scmp.eq.s32.totalorder %s13, 0
    %p138 = por %p136, %p137
    %p139 = scmp.ne.s32.totalorder %s131, %s133
    %p140 = scmp.eq.s32.totalorder %s18, 1
    %p141 = por %p139, %p140
    %p142 = scmp.ne.s32.totalorder %s133, %s134
    %p143 = scmp.eq.s32.totalorder %s18, 0
    %p144 = por %p142, %p143
    %p145 = scmp.ne.s32.totalorder %s133, %s134
    %p146 = scmp.eq.s32.totalorder %s19, 1
    %p147 = por %p145, %p146
    %p149 = scmp.ne.s32.totalorder %s134, %s148
    %p150 = scmp.eq.s32.totalorder %s19, 0
    %p151 = por %p149, %p150
    %s153 = sadd.s32 %s152, 1
    %p156 = scmp.eq.s32.totalorder %s13, 1
    %p157 = scmp.ne.s32.totalorder %s152, %s154
    %p158 = scmp.eq.s32.totalorder %s13, 0
    %p159 = por %p157, %p158
    %p160 = scmp.ne.s32.totalorder %s152, %s154
    %p161 = scmp.eq.s32.totalorder %s18, 1
    %p162 = por %p160, %p161
    %p163 = scmp.ne.s32.totalorder %s154, %s155
    %p164 = scmp.eq.s32.totalorder %s18, 0
    %p165 = por %p163, %p164
    %p166 = scmp.ne.s32.totalorder %s154, %s155
    %p167 = scmp.eq.s32.totalorder %s19, 1
    %p168 = por %p166, %p167
    %p170 = scmp.ne.s32.totalorder %s155, %s169
    %p171 = scmp.eq.s32.totalorder %s19, 0
    %p172 = por %p170, %p171
    %s173 = ssub.s32 %s13, %s20
    %p174 = scmp.eq.s32.totalorder %s173, 0
    %s176 = sadd.s32 %s175, 1
    %s177 = scalar_select %p174, %s175, %s176
    %p180 = pneg %p174
    %p181 = scmp.eq.s32.totalorder %s13, 1
    %p182 = por %p180, %p181
    %p183 = scmp.ne.s32.totalorder %s175, %s178
    %p184 = scmp.eq.s32.totalorder %s13, 0
    %p185 = por %p183, %p184
    %p186 = scmp.ne.s32.totalorder %s175, %s178
    %p187 = scmp.eq.s32.totalorder %s18, 1
    %p188 = por %p186, %p187
    %p189 = scmp.ne.s32.totalorder %s178, %s179
    %p190 = scmp.eq.s32.totalorder %s18, 0
    %p191 = por %p189, %p190
    %p192 = scmp.ne.s32.totalorder %s178, %s179
    %p193 = scmp.eq.s32.totalorder %s19, 1
    %p194 = por %p192, %p193
    %p196 = scmp.ne.s32.totalorder %s179, %s195
    %p197 = scmp.eq.s32.totalorder %s19, 0
    %p198 = por %p196, %p197
    %p199 = scmp.le.s32.totalorder 1, %s13
    %p200 = scmp.lt.s32.totalorder %s13, 3
    %p201 = pnand %p199, %p200
    %p202 = pneg %p201
    // Predicated region
    $region9: #{feed_forward_nn.1} parent=5 // pred_check
      _
    $region10: #{feed_forward_nn.1} parent=5 // pred_check_branch
      %204 = sbr.rel (%p201) target = $region12
    $region11: #{feed_forward_nn.1} parent=5 // pred_region
      %s205 = ssub.s32 %s13, 1
      // Predicated region
      $region13: #{feed_forward_nn.1} parent=11 // pred_check
        %p206 = pneg %p60
      $region14: #{feed_forward_nn.1} parent=11 // pred_check_branch
        %208 = sbr.rel (%p206) target = $region16
      $region15: #{feed_forward_nn.1} parent=11 // pred_region
        _
      $region16: #{feed_forward_nn.1} parent=11 // pred_fallthru
        _
      // Predicated region
      $region17: #{feed_forward_nn.1} parent=11 // pred_check
        %p209 = pneg %p81
      $region18: #{feed_forward_nn.1} parent=11 // pred_check_branch
        %211 = sbr.rel (%p209) target = $region20
      $region19: #{feed_forward_nn.1} parent=11 // pred_region
        _
      $region20: #{feed_forward_nn.1} parent=11 // pred_fallthru
        _
      // Predicated region
      $region21: #{feed_forward_nn.1} parent=11 // pred_check
        %p212 = pneg %p102
      $region22: #{feed_forward_nn.1} parent=11 // pred_check_branch
        %214 = sbr.rel (%p212) target = $region24
      $region23: #{feed_forward_nn.1} parent=11 // pred_region
        _
      $region24: #{feed_forward_nn.1} parent=11 // pred_fallthru
        _
      // Predicated region
      $region25: #{feed_forward_nn.1} parent=11 // pred_check
        %p215 = pneg %p123
      $region26: #{feed_forward_nn.1} parent=11 // pred_check_branch
        %217 = sbr.rel (%p215) target = $region28
      $region27: #{feed_forward_nn.1} parent=11 // pred_region
        _
      $region28: #{feed_forward_nn.1} parent=11 // pred_fallthru
        _
      // Predicated region
      $region29: #{feed_forward_nn.1} parent=11 // pred_check
        %p218 = pneg %p144
      $region30: #{feed_forward_nn.1} parent=11 // pred_check_branch
        %220 = sbr.rel (%p218) target = $region32
      $region31: #{feed_forward_nn.1} parent=11 // pred_region
        _
      $region32: #{feed_forward_nn.1} parent=11 // pred_fallthru
        _
      // Predicated region
      $region33: #{feed_forward_nn.1} parent=11 // pred_check
        %p221 = pneg %p165
      $region34: #{feed_forward_nn.1} parent=11 // pred_check_branch
        %223 = sbr.rel (%p221) target = $region36
      $region35: #{feed_forward_nn.1} parent=11 // pred_region
        _
      $region36: #{feed_forward_nn.1} parent=11 // pred_fallthru
        _
    $region12: #{feed_forward_nn.1} parent=5 // pred_fallthru
      _
    %p224 = scmp.lt.s32.totalorder %s13, 2
    // Predicated region
    $region37: #{feed_forward_nn.1} parent=5 // pred_check
      %p225 = pneg %p224
    $region38: #{feed_forward_nn.1} parent=5 // pred_check_branch
      %227 = sbr.rel (%p225) target = $region40
    $region39: #{feed_forward_nn.1} parent=5 // pred_region
      // Predicated region
      $region41: #{feed_forward_nn.1} parent=39 // pred_check
        %p228 = pneg %p33
      $region42: #{feed_forward_nn.1} parent=39 // pred_check_branch
        %230 = sbr.rel (%p228) target = $region44
      $region43: #{feed_forward_nn.1} parent=39 // pred_region
        %s231 = smul.u32 32, %s13
        %p232 = scmp.lt.s32.totalorder %s231, 63
        %s233 = scalar_select %p232, %s231, 63
        %s234 = smul.addr %s233, 8
        %s235 = scalar_lea.vmem %s0, %s234
        %s236 = smul.u32 32, %s13
      $region44: #{feed_forward_nn.1} parent=39 // pred_fallthru
        _
    $region40: #{feed_forward_nn.1} parent=5 // pred_fallthru
      _
    %p237 = scmp.le.s32.totalorder 1, %s13
    %p238 = scmp.lt.s32.totalorder %s13, 3
    %p239 = pnand %p237, %p238
    %p240 = pneg %p239
    // Predicated region
    $region45: #{feed_forward_nn.1} parent=5 // pred_check
      _
    $region46: #{feed_forward_nn.1} parent=5 // pred_check_branch
      %242 = sbr.rel (%p239) target = $region48
    $region47: #{feed_forward_nn.1} parent=5 // pred_region
      %s243 = ssub.s32 %s13, 1
      %s244 = smul.u32 32, %s18
      %p245 = scmp.lt.s32.totalorder %s244, 63
      %s246 = scalar_select %p245, %s244, 63
      %s247 = smul.addr %s246, 8
      %s248 = scalar_lea.vmem %s0, %s247
      %p249 = pneg %p39
      %p250 = pneg %p36
      %p251 = pneg %p60
      %p252 = pneg %p57
      %p253 = pneg %p81
      %p254 = pneg %p78
      %p255 = pneg %p102
      %p256 = pneg %p99
      %p257 = pneg %p123
      %p258 = pneg %p120
      %p259 = pneg %p144
      %p260 = pneg %p141
      %p261 = pneg %p165
      %p262 = pneg %p162
      %p263 = pneg %p191
      %p264 = pneg %p188
      %s265 = smul.u32 32, %s18
      %p266 = scmp.lt.s32.totalorder %s265, 63
      %s267 = scalar_select %p266, %s265, 63
      %s268 = smul.addr %s267, 8
      %s269 = scalar_lea.vmem %s7, %s268
      %s270 = smul.u32 32, %s18
      %p271 = scmp.lt.s32.totalorder %s270, 63
      %s272 = scalar_select %p271, %s270, 63
      %s273 = smul.addr %s272, 8
      %s274 = scalar_lea.vmem %s0, %s273
      %s275 = smul.u32 32, %s18
      %s276 = smul.u32 32, %s18
      %p277 = scmp.lt.s32.totalorder %s276, 63
      %s278 = scalar_select %p277, %s276, 63
      %s279 = smul.addr %s278, 8
      %s280 = scalar_lea.vmem %s7, %s279
      %s281 = smul.u32 32, %s18
      %v283 = vld [vmem:[%s274] sm:$0xff]
      %v284 = vld [vmem:[%s274 + $0x8] sm:$0xff]
      %v285 = vld [vmem:[%s274 + $0x10] sm:$0xff]
      %v286 = vld [vmem:[%s274 + $0x18] sm:$0xff]
      %v287 = vld [vmem:[%s274 + $0x20] sm:$0xff]
      %v288 = vld [vmem:[%s274 + $0x28] sm:$0xff]
      %v289 = vld [vmem:[%s274 + $0x30] sm:$0xff]
      %v290 = vld [vmem:[%s274 + $0x38] sm:$0xff]
      %v291 = vld [vmem:[%s274 + $0x40] sm:$0xff]
      %v292 = vld [vmem:[%s274 + $0x48] sm:$0xff]
      %v293 = vld [vmem:[%s274 + $0x50] sm:$0xff]
      %v294 = vld [vmem:[%s274 + $0x58] sm:$0xff]
      %v295 = vld [vmem:[%s274 + $0x60] sm:$0xff]
      %v296 = vld [vmem:[%s274 + $0x68] sm:$0xff]
      %v297 = vld [vmem:[%s274 + $0x70] sm:$0xff]
      %v298 = vld [vmem:[%s274 + $0x78] sm:$0xff]
      %v299 = vld [vmem:[%s274 + $0x80] sm:$0xff]
      %v300 = vld [vmem:[%s274 + $0x88] sm:$0xff]
      %v301 = vld [vmem:[%s274 + $0x90] sm:$0xff]
      %v302 = vld [vmem:[%s274 + $0x98] sm:$0xff]
      %v303 = vld [vmem:[%s274 + $0xa0] sm:$0xff]
      %v304 = vld [vmem:[%s274 + $0xa8] sm:$0xff]
      %v305 = vld [vmem:[%s274 + $0xb0] sm:$0xff]
      %v306 = vld [vmem:[%s274 + $0xb8] sm:$0xff]
      %v307 = vld [vmem:[%s274 + $0xc0] sm:$0xff]
      %v308 = vld [vmem:[%s274 + $0xc8] sm:$0xff]
      %v309 = vld [vmem:[%s274 + $0xd0] sm:$0xff]
      %v310 = vld [vmem:[%s274 + $0xd8] sm:$0xff]
      %v311 = vld [vmem:[%s274 + $0xe0] sm:$0xff]
      %v312 = vld [vmem:[%s274 + $0xe8] sm:$0xff]
      %v313 = vld [vmem:[%s274 + $0xf0] sm:$0xff]
      %v314 = vld [vmem:[%s274 + $0xf8] sm:$0xff]
      %v315 = vld [vmem:[%s1] sm:$0xf]
      %v316 = vld [vmem:[%s1 + $0x4] sm:$0xf]
      %v317 = vld [vmem:[%s2] sm:$0x1]
      %v318 = vunpack.c.l.bf16 %v317
      %v319 = vpack.c.bf16 %v284, %v283
      %v320 = vpack.c.bf16 %v286, %v285
      %v321 = vpack.c.bf16 %v288, %v287
      %v322 = vpack.c.bf16 %v290, %v289
      %v323 = vpack.c.bf16 %v292, %v291
      %v324 = vpack.c.bf16 %v294, %v293
      %v325 = vpack.c.bf16 %v296, %v295
      %v326 = vpack.c.bf16 %v298, %v297
      %v327 = vpack.c.bf16 %v300, %v299
      %v328 = vpack.c.bf16 %v302, %v301
      %v329 = vpack.c.bf16 %v304, %v303
      %v330 = vpack.c.bf16 %v306, %v305
      %v331 = vpack.c.bf16 %v308, %v307
      %v332 = vpack.c.bf16 %v310, %v309
      %v333 = vpack.c.bf16 %v312, %v311
      %v334 = vpack.c.bf16 %v314, %v313
      %v335 = vlaneseq
      %v336 = vshrl.u32 %v335, 7
      %v337 = vsub.s32 0, %v336
      %v338 = vrot.slane %v318, %v337
      %v341 = vunpack.c.l.b16 %v315
      %v342 = vunpack.c.l.b16 %v316
      %v343 = vpack.c.b16 %v342, %v341
      %vm345 = vcmask 130048
      %v347 = vsel %vm345, %v319, 0
      %v350 = vsel %vm345, %v320, 0
      %v353 = vsel %vm345, %v321, 0
      %v356 = vsel %vm345, %v322, 0
      %v359 = vsel %vm345, %v323, 0
      %v362 = vsel %vm345, %v324, 0
      %v365 = vsel %vm345, %v325, 0
      %v368 = vsel %vm345, %v326, 0
      %v371 = vsel %vm345, %v327, 0
      %v374 = vsel %vm345, %v328, 0
      %v377 = vsel %vm345, %v329, 0
      %v380 = vsel %vm345, %v330, 0
      %v383 = vsel %vm345, %v331, 0
      %v386 = vsel %vm345, %v332, 0
      %v389 = vsel %vm345, %v333, 0
      %v392 = vsel %vm345, %v334, 0
      %394 = vmatprep.subr.bf16.mxu0 0
      %395 = vmatpush1.bf16.msra.mxu0 0
      %396 = vmatprep.subr.bf16.mxu0 0
      %397 = vmatpush1.bf16.msra.mxu0 0
      %398 = vmatprep.subr.bf16.mxu0 0
      %399 = vmatpush1.bf16.msra.mxu0 0
      %400 = vmatprep.subr.bf16.mxu0 0
      %401 = vmatpush1.bf16.msra.mxu0 0
      %402 = vmatprep.subr.bf16.mxu0 0
      %403 = vmatpush1.bf16.msra.mxu0 0
      %404 = vmatprep.subr.bf16.mxu0 0
      %405 = vmatpush1.bf16.msra.mxu0 0
      %406 = vmatprep.subr.bf16.mxu0 0
      %407 = vmatpush1.bf16.msra.mxu0 0
      %408 = vmatprep.subr.bf16.mxu0 0
      %409 = vmatpush1.bf16.msra.mxu0 %v343
      %410 = vmatprep.subr.bf16.mxu0 0
      %411 = vmatpush2.bf16.msra.mxu0 0
      %412 = vmatprep.subr.bf16.mxu0 0
      %413 = vmatpush2.bf16.msra.mxu0 0
      %414 = vmatprep.subr.bf16.mxu0 0
      %415 = vmatpush2.bf16.msra.mxu0 0
      %416 = vmatprep.subr.bf16.mxu0 0
      %417 = vmatpush2.bf16.msra.mxu0 0
      %418 = vmatprep.subr.bf16.mxu0 0
      %419 = vmatpush2.bf16.msra.mxu0 0
      %420 = vmatprep.subr.bf16.mxu0 0
      %421 = vmatpush2.bf16.msra.mxu0 0
      %422 = vmatprep.subr.bf16.mxu0 0
      %423 = vmatpush2.bf16.msra.mxu0 0
      %424 = vmatprep.subr.bf16.mxu0 0
      %425 = vmatpush2.bf16.msra.mxu0 0
      %426 = vmatprep.mubr.bf16.mxu0 0
      %427 = vmatmul.mubr.bf16.gmra.mxu0 %v347
      %v428 = vpop.f32.mrf.mxu0
      %v429 = vadd.f32 %v338, %v428
      %v430 = vpop.f32.mrf.mxu0
      %v431 = vpop.f32.mrf.mxu0
      %v432 = vadd.f32 %v338, %v431
      %v433 = vpop.f32.mrf.mxu0
      %434 = vmatprep.mubr.bf16.mxu0 0
      %435 = vmatmul.mubr.bf16.gmra.mxu0 %v350
      %v436 = vpop.f32.mrf.mxu0
      %v437 = vadd.f32 %v338, %v436
      %v438 = vpop.f32.mrf.mxu0
      %v439 = vpop.f32.mrf.mxu0
      %v440 = vadd.f32 %v338, %v439
      %v441 = vpop.f32.mrf.mxu0
      %442 = vmatprep.mubr.bf16.mxu0 0
      %443 = vmatmul.mubr.bf16.gmra.mxu0 %v353
      %v444 = vpop.f32.mrf.mxu0
      %v445 = vadd.f32 %v338, %v444
      %v446 = vpop.f32.mrf.mxu0
      %v447 = vpop.f32.mrf.mxu0
      %v448 = vadd.f32 %v338, %v447
      %v449 = vpop.f32.mrf.mxu0
      %450 = vmatprep.mubr.bf16.mxu0 0
      %451 = vmatmul.mubr.bf16.gmra.mxu0 %v356
      %v452 = vpop.f32.mrf.mxu0
      %v453 = vadd.f32 %v338, %v452
      %v454 = vpop.f32.mrf.mxu0
      %v455 = vpop.f32.mrf.mxu0
      %v456 = vadd.f32 %v338, %v455
      %v457 = vpop.f32.mrf.mxu0
      %458 = vmatprep.mubr.bf16.mxu0 0
      %459 = vmatmul.mubr.bf16.gmra.mxu0 %v359
      %v460 = vpop.f32.mrf.mxu0
      %v461 = vadd.f32 %v338, %v460
      %v462 = vpop.f32.mrf.mxu0
      %v463 = vpop.f32.mrf.mxu0
      %v464 = vadd.f32 %v338, %v463
      %v465 = vpop.f32.mrf.mxu0
      %466 = vmatprep.mubr.bf16.mxu0 0
      %467 = vmatmul.mubr.bf16.gmra.mxu0 %v362
      %v468 = vpop.f32.mrf.mxu0
      %v469 = vadd.f32 %v338, %v468
      %v470 = vpop.f32.mrf.mxu0
      %v471 = vpop.f32.mrf.mxu0
      %v472 = vadd.f32 %v338, %v471
      %v473 = vpop.f32.mrf.mxu0
      %474 = vmatprep.mubr.bf16.mxu0 0
      %475 = vmatmul.mubr.bf16.gmra.mxu0 %v365
      %v476 = vpop.f32.mrf.mxu0
      %v477 = vadd.f32 %v338, %v476
      %v478 = vpop.f32.mrf.mxu0
      %v479 = vpop.f32.mrf.mxu0
      %v480 = vadd.f32 %v338, %v479
      %v481 = vpop.f32.mrf.mxu0
      %482 = vmatprep.mubr.bf16.mxu0 0
      %483 = vmatmul.mubr.bf16.gmra.mxu0 %v368
      %v484 = vpop.f32.mrf.mxu0
      %v485 = vadd.f32 %v338, %v484
      %v486 = vpop.f32.mrf.mxu0
      %v487 = vpop.f32.mrf.mxu0
      %v488 = vadd.f32 %v338, %v487
      %v489 = vpop.f32.mrf.mxu0
      %490 = vmatprep.mubr.bf16.mxu0 0
      %491 = vmatmul.mubr.bf16.gmra.mxu0 %v371
      %v492 = vpop.f32.mrf.mxu0
      %v493 = vadd.f32 %v338, %v492
      %v494 = vpop.f32.mrf.mxu0
      %v495 = vpop.f32.mrf.mxu0
      %v496 = vadd.f32 %v338, %v495
      %v497 = vpop.f32.mrf.mxu0
      %498 = vmatprep.mubr.bf16.mxu0 0
      %499 = vmatmul.mubr.bf16.gmra.mxu0 %v374
      %v500 = vpop.f32.mrf.mxu0
      %v501 = vadd.f32 %v338, %v500
      %v502 = vpop.f32.mrf.mxu0
      %v503 = vpop.f32.mrf.mxu0
      %v504 = vadd.f32 %v338, %v503
      %v505 = vpop.f32.mrf.mxu0
      %506 = vmatprep.mubr.bf16.mxu0 0
      %507 = vmatmul.mubr.bf16.gmra.mxu0 %v377
      %v508 = vpop.f32.mrf.mxu0
      %v509 = vadd.f32 %v338, %v508
      %v510 = vpop.f32.mrf.mxu0
      %v511 = vpop.f32.mrf.mxu0
      %v512 = vadd.f32 %v338, %v511
      %v513 = vpop.f32.mrf.mxu0
      %514 = vmatprep.mubr.bf16.mxu0 0
      %515 = vmatmul.mubr.bf16.gmra.mxu0 %v380
      %v516 = vpop.f32.mrf.mxu0
      %v517 = vadd.f32 %v338, %v516
      %v518 = vpop.f32.mrf.mxu0
      %v519 = vpop.f32.mrf.mxu0
      %v520 = vadd.f32 %v338, %v519
      %v521 = vpop.f32.mrf.mxu0
      %522 = vmatprep.mubr.bf16.mxu0 0
      %523 = vmatmul.mubr.bf16.gmra.mxu0 %v383
      %v524 = vpop.f32.mrf.mxu0
      %v525 = vadd.f32 %v338, %v524
      %v526 = vpop.f32.mrf.mxu0
      %v527 = vpop.f32.mrf.mxu0
      %v528 = vadd.f32 %v338, %v527
      %v529 = vpop.f32.mrf.mxu0
      %530 = vmatprep.mubr.bf16.mxu0 0
      %531 = vmatmul.mubr.bf16.gmra.mxu0 %v386
      %v532 = vpop.f32.mrf.mxu0
      %v533 = vadd.f32 %v338, %v532
      %v534 = vpop.f32.mrf.mxu0
      %v535 = vpop.f32.mrf.mxu0
      %v536 = vadd.f32 %v338, %v535
      %v537 = vpop.f32.mrf.mxu0
      %538 = vmatprep.mubr.bf16.mxu0 0
      %539 = vmatmul.mubr.bf16.gmra.mxu0 %v389
      %v540 = vpop.f32.mrf.mxu0
      %v541 = vadd.f32 %v338, %v540
      %v542 = vpop.f32.mrf.mxu0
      %v543 = vpop.f32.mrf.mxu0
      %v544 = vadd.f32 %v338, %v543
      %v545 = vpop.f32.mrf.mxu0
      %546 = vmatprep.mubr.bf16.mxu0 0
      %547 = vmatmul.mubr.bf16.gmra.mxu0 %v392
      %v548 = vpop.f32.mrf.mxu0
      %v549 = vadd.f32 %v338, %v548
      %v550 = vpop.f32.mrf.mxu0
      %v551 = vpop.f32.mrf.mxu0
      %v552 = vadd.f32 %v338, %v551
      %v553 = vpop.f32.mrf.mxu0
      %554 = vdwg.mxu0
      %v555 = vmax.f32 %v429, 0.0
      %v556 = vmax.f32 %v432, 0.0
      %v557 = vmax.f32 %v437, 0.0
      %v558 = vmax.f32 %v440, 0.0
      %v559 = vmax.f32 %v445, 0.0
      %v560 = vmax.f32 %v448, 0.0
      %v561 = vmax.f32 %v453, 0.0
      %v562 = vmax.f32 %v456, 0.0
      %v563 = vmax.f32 %v461, 0.0
      %v564 = vmax.f32 %v464, 0.0
      %v565 = vmax.f32 %v469, 0.0
      %v566 = vmax.f32 %v472, 0.0
      %v567 = vmax.f32 %v477, 0.0
      %v568 = vmax.f32 %v480, 0.0
      %v569 = vmax.f32 %v485, 0.0
      %v570 = vmax.f32 %v488, 0.0
      %v571 = vmax.f32 %v493, 0.0
      %v572 = vmax.f32 %v496, 0.0
      %v573 = vmax.f32 %v501, 0.0
      %v574 = vmax.f32 %v504, 0.0
      %v575 = vmax.f32 %v509, 0.0
      %v576 = vmax.f32 %v512, 0.0
      %v577 = vmax.f32 %v517, 0.0
      %v578 = vmax.f32 %v520, 0.0
      %v579 = vmax.f32 %v525, 0.0
      %v580 = vmax.f32 %v528, 0.0
      %v581 = vmax.f32 %v533, 0.0
      %v582 = vmax.f32 %v536, 0.0
      %v583 = vmax.f32 %v541, 0.0
      %v584 = vmax.f32 %v544, 0.0
      %v585 = vmax.f32 %v549, 0.0
      %v586 = vmax.f32 %v552, 0.0
      %v587 = vld [vmem:[%s3] sm:$0xf]
      %v588 = vld [vmem:[%s3 + $0x4] sm:$0xf]
      %v589 = vld [vmem:[%s3 + $0x8] sm:$0xf]
      %v590 = vld [vmem:[%s3 + $0xc] sm:$0xf]
      %v591 = vld [vmem:[%s3 + $0x10] sm:$0xf]
      %v592 = vld [vmem:[%s3 + $0x14] sm:$0xf]
      %v593 = vld [vmem:[%s3 + $0x18] sm:$0xf]
      %v594 = vld [vmem:[%s3 + $0x1c] sm:$0xf]
      %v595 = vld [vmem:[%s3 + $0x20] sm:$0xf]
      %v596 = vld [vmem:[%s3 + $0x24] sm:$0xf]
      %v597 = vld [vmem:[%s3 + $0x28] sm:$0xf]
      %v598 = vld [vmem:[%s3 + $0x2c] sm:$0xf]
      %v599 = vld [vmem:[%s3 + $0x30] sm:$0xf]
      %v600 = vld [vmem:[%s3 + $0x34] sm:$0xf]
      %v601 = vld [vmem:[%s3 + $0x38] sm:$0xf]
      %v602 = vld [vmem:[%s3 + $0x3c] sm:$0xf]
      %v603 = vld [vmem:[%s4] sm:$0x1]
      %v604 = vunpack.c.l.bf16 %v603
      %v605 = vpack.c.bf16 %v556, %v555
      %v606 = vpack.c.bf16 %v558, %v557
      %v607 = vpack.c.bf16 %v560, %v559
      %v608 = vpack.c.bf16 %v562, %v561
      %v609 = vpack.c.bf16 %v564, %v563
      %v610 = vpack.c.bf16 %v566, %v565
      %v611 = vpack.c.bf16 %v568, %v567
      %v612 = vpack.c.bf16 %v570, %v569
      %v613 = vpack.c.bf16 %v572, %v571
      %v614 = vpack.c.bf16 %v574, %v573
      %v615 = vpack.c.bf16 %v576, %v575
      %v616 = vpack.c.bf16 %v578, %v577
      %v617 = vpack.c.bf16 %v580, %v579
      %v618 = vpack.c.bf16 %v582, %v581
      %v619 = vpack.c.bf16 %v584, %v583
      %v620 = vpack.c.bf16 %v586, %v585
      %v621 = vlaneseq
      %v622 = vshrl.u32 %v621, 7
      %v623 = vsub.s32 0, %v622
      %v624 = vrot.slane %v604, %v623
      %v641 = vunpack.c.l.b16 %v587
      %v642 = vunpack.c.l.b16 %v588
      %v643 = vunpack.c.l.b16 %v589
      %v644 = vunpack.c.l.b16 %v590
      %v645 = vunpack.c.l.b16 %v591
      %v646 = vunpack.c.l.b16 %v592
      %v647 = vunpack.c.l.b16 %v593
      %v648 = vunpack.c.l.b16 %v594
      %v649 = vunpack.c.l.b16 %v595
      %v650 = vunpack.c.l.b16 %v596
      %v651 = vunpack.c.l.b16 %v597
      %v652 = vunpack.c.l.b16 %v598
      %v653 = vunpack.c.l.b16 %v599
      %v654 = vunpack.c.l.b16 %v600
      %v655 = vunpack.c.l.b16 %v601
      %v656 = vunpack.c.l.b16 %v602
      %v657 = vpack.c.b16 %v642, %v641
      %v658 = vpack.c.b16 %v644, %v643
      %v659 = vpack.c.b16 %v646, %v645
      %v660 = vpack.c.b16 %v648, %v647
      %v661 = vpack.c.b16 %v650, %v649
      %v662 = vpack.c.b16 %v652, %v651
      %v663 = vpack.c.b16 %v654, %v653
      %v664 = vpack.c.b16 %v656, %v655
      %673 = vmatprep.subr.bf16.mxu0 0
      %674 = vmatpush1.bf16.msra.mxu0 %v664
      %675 = vmatprep.subr.bf16.mxu0 0
      %676 = vmatpush1.bf16.msra.mxu0 %v663
      %677 = vmatprep.subr.bf16.mxu0 0
      %678 = vmatpush1.bf16.msra.mxu0 %v662
      %679 = vmatprep.subr.bf16.mxu0 0
      %680 = vmatpush1.bf16.msra.mxu0 %v661
      %681 = vmatprep.subr.bf16.mxu0 0
      %682 = vmatpush1.bf16.msra.mxu0 %v660
      %683 = vmatprep.subr.bf16.mxu0 0
      %684 = vmatpush1.bf16.msra.mxu0 %v659
      %685 = vmatprep.subr.bf16.mxu0 0
      %686 = vmatpush1.bf16.msra.mxu0 %v658
      %687 = vmatprep.subr.bf16.mxu0 0
      %688 = vmatpush1.bf16.msra.mxu0 %v657
      %689 = vmatprep.subr.bf16.mxu0 0
      %690 = vmatpush2.bf16.msra.mxu0 0
      %691 = vmatprep.subr.bf16.mxu0 0
      %692 = vmatpush2.bf16.msra.mxu0 0
      %693 = vmatprep.subr.bf16.mxu0 0
      %694 = vmatpush2.bf16.msra.mxu0 0
      %695 = vmatprep.subr.bf16.mxu0 0
      %696 = vmatpush2.bf16.msra.mxu0 0
      %697 = vmatprep.subr.bf16.mxu0 0
      %698 = vmatpush2.bf16.msra.mxu0 0
      %699 = vmatprep.subr.bf16.mxu0 0
      %700 = vmatpush2.bf16.msra.mxu0 0
      %701 = vmatprep.subr.bf16.mxu0 0
      %702 = vmatpush2.bf16.msra.mxu0 0
      %703 = vmatprep.subr.bf16.mxu0 0
      %704 = vmatpush2.bf16.msra.mxu0 0
      %705 = vmatprep.mubr.bf16.mxu0 0
      %706 = vmatmul.mubr.bf16.gmra.mxu0 %v605
      %v707 = vpop.f32.mrf.mxu0
      %v708 = vadd.f32 %v624, %v707
      %v709 = vpop.f32.mrf.mxu0
      %v710 = vpop.f32.mrf.mxu0
      %v711 = vadd.f32 %v624, %v710
      %v712 = vpop.f32.mrf.mxu0
      %713 = vmatprep.mubr.bf16.mxu0 0
      %714 = vmatmul.mubr.bf16.gmra.mxu0 %v606
      %v715 = vpop.f32.mrf.mxu0
      %v716 = vadd.f32 %v624, %v715
      %v717 = vpop.f32.mrf.mxu0
      %v718 = vpop.f32.mrf.mxu0
      %v719 = vadd.f32 %v624, %v718
      %v720 = vpop.f32.mrf.mxu0
      %721 = vmatprep.mubr.bf16.mxu0 0
      %722 = vmatmul.mubr.bf16.gmra.mxu0 %v607
      %v723 = vpop.f32.mrf.mxu0
      %v724 = vadd.f32 %v624, %v723
      %v725 = vpop.f32.mrf.mxu0
      %v726 = vpop.f32.mrf.mxu0
      %v727 = vadd.f32 %v624, %v726
      %v728 = vpop.f32.mrf.mxu0
      %729 = vmatprep.mubr.bf16.mxu0 0
      %730 = vmatmul.mubr.bf16.gmra.mxu0 %v608
      %v731 = vpop.f32.mrf.mxu0
      %v732 = vadd.f32 %v624, %v731
      %v733 = vpop.f32.mrf.mxu0
      %v734 = vpop.f32.mrf.mxu0
      %v735 = vadd.f32 %v624, %v734
      %v736 = vpop.f32.mrf.mxu0
      %737 = vmatprep.mubr.bf16.mxu0 0
      %738 = vmatmul.mubr.bf16.gmra.mxu0 %v609
      %v739 = vpop.f32.mrf.mxu0
      %v740 = vadd.f32 %v624, %v739
      %v741 = vpop.f32.mrf.mxu0
      %v742 = vpop.f32.mrf.mxu0
      %v743 = vadd.f32 %v624, %v742
      %v744 = vpop.f32.mrf.mxu0
      %745 = vmatprep.mubr.bf16.mxu0 0
      %746 = vmatmul.mubr.bf16.gmra.mxu0 %v610
      %v747 = vpop.f32.mrf.mxu0
      %v748 = vadd.f32 %v624, %v747
      %v749 = vpop.f32.mrf.mxu0
      %v750 = vpop.f32.mrf.mxu0
      %v751 = vadd.f32 %v624, %v750
      %v752 = vpop.f32.mrf.mxu0
      %753 = vmatprep.mubr.bf16.mxu0 0
      %754 = vmatmul.mubr.bf16.gmra.mxu0 %v611
      %v755 = vpop.f32.mrf.mxu0
      %v756 = vadd.f32 %v624, %v755
      %v757 = vpop.f32.mrf.mxu0
      %v758 = vpop.f32.mrf.mxu0
      %v759 = vadd.f32 %v624, %v758
      %v760 = vpop.f32.mrf.mxu0
      %761 = vmatprep.mubr.bf16.mxu0 0
      %762 = vmatmul.mubr.bf16.gmra.mxu0 %v612
      %v763 = vpop.f32.mrf.mxu0
      %v764 = vadd.f32 %v624, %v763
      %v765 = vpop.f32.mrf.mxu0
      %v766 = vpop.f32.mrf.mxu0
      %v767 = vadd.f32 %v624, %v766
      %v768 = vpop.f32.mrf.mxu0
      %769 = vmatprep.mubr.bf16.mxu0 0
      %770 = vmatmul.mubr.bf16.gmra.mxu0 %v613
      %v771 = vpop.f32.mrf.mxu0
      %v772 = vadd.f32 %v624, %v771
      %v773 = vpop.f32.mrf.mxu0
      %v774 = vpop.f32.mrf.mxu0
      %v775 = vadd.f32 %v624, %v774
      %v776 = vpop.f32.mrf.mxu0
      %777 = vmatprep.mubr.bf16.mxu0 0
      %778 = vmatmul.mubr.bf16.gmra.mxu0 %v614
      %v779 = vpop.f32.mrf.mxu0
      %v780 = vadd.f32 %v624, %v779
      %v781 = vpop.f32.mrf.mxu0
      %v782 = vpop.f32.mrf.mxu0
      %v783 = vadd.f32 %v624, %v782
      %v784 = vpop.f32.mrf.mxu0
      %785 = vmatprep.mubr.bf16.mxu0 0
      %786 = vmatmul.mubr.bf16.gmra.mxu0 %v615
      %v787 = vpop.f32.mrf.mxu0
      %v788 = vadd.f32 %v624, %v787
      %v789 = vpop.f32.mrf.mxu0
      %v790 = vpop.f32.mrf.mxu0
      %v791 = vadd.f32 %v624, %v790
      %v792 = vpop.f32.mrf.mxu0
      %793 = vmatprep.mubr.bf16.mxu0 0
      %794 = vmatmul.mubr.bf16.gmra.mxu0 %v616
      %v795 = vpop.f32.mrf.mxu0
      %v796 = vadd.f32 %v624, %v795
      %v797 = vpop.f32.mrf.mxu0
      %v798 = vpop.f32.mrf.mxu0
      %v799 = vadd.f32 %v624, %v798
      %v800 = vpop.f32.mrf.mxu0
      %801 = vmatprep.mubr.bf16.mxu0 0
      %802 = vmatmul.mubr.bf16.gmra.mxu0 %v617
      %v803 = vpop.f32.mrf.mxu0
      %v804 = vadd.f32 %v624, %v803
      %v805 = vpop.f32.mrf.mxu0
      %v806 = vpop.f32.mrf.mxu0
      %v807 = vadd.f32 %v624, %v806
      %v808 = vpop.f32.mrf.mxu0
      %809 = vmatprep.mubr.bf16.mxu0 0
      %810 = vmatmul.mubr.bf16.gmra.mxu0 %v618
      %v811 = vpop.f32.mrf.mxu0
      %v812 = vadd.f32 %v624, %v811
      %v813 = vpop.f32.mrf.mxu0
      %v814 = vpop.f32.mrf.mxu0
      %v815 = vadd.f32 %v624, %v814
      %v816 = vpop.f32.mrf.mxu0
      %817 = vmatprep.mubr.bf16.mxu0 0
      %818 = vmatmul.mubr.bf16.gmra.mxu0 %v619
      %v819 = vpop.f32.mrf.mxu0
      %v820 = vadd.f32 %v624, %v819
      %v821 = vpop.f32.mrf.mxu0
      %v822 = vpop.f32.mrf.mxu0
      %v823 = vadd.f32 %v624, %v822
      %v824 = vpop.f32.mrf.mxu0
      %825 = vmatprep.mubr.bf16.mxu0 0
      %826 = vmatmul.mubr.bf16.gmra.mxu0 %v620
      %v827 = vpop.f32.mrf.mxu0
      %v828 = vadd.f32 %v624, %v827
      %v829 = vpop.f32.mrf.mxu0
      %v830 = vpop.f32.mrf.mxu0
      %v831 = vadd.f32 %v624, %v830
      %v832 = vpop.f32.mrf.mxu0
      %833 = vdwg.mxu0
      %v834 = vmax.f32 %v708, 0.0
      %v835 = vmax.f32 %v711, 0.0
      %v836 = vmax.f32 %v716, 0.0
      %v837 = vmax.f32 %v719, 0.0
      %v838 = vmax.f32 %v724, 0.0
      %v839 = vmax.f32 %v727, 0.0
      %v840 = vmax.f32 %v732, 0.0
      %v841 = vmax.f32 %v735, 0.0
      %v842 = vmax.f32 %v740, 0.0
      %v843 = vmax.f32 %v743, 0.0
      %v844 = vmax.f32 %v748, 0.0
      %v845 = vmax.f32 %v751, 0.0
      %v846 = vmax.f32 %v756, 0.0
      %v847 = vmax.f32 %v759, 0.0
      %v848 = vmax.f32 %v764, 0.0
      %v849 = vmax.f32 %v767, 0.0
      %v850 = vmax.f32 %v772, 0.0
      %v851 = vmax.f32 %v775, 0.0
      %v852 = vmax.f32 %v780, 0.0
      %v853 = vmax.f32 %v783, 0.0
      %v854 = vmax.f32 %v788, 0.0
      %v855 = vmax.f32 %v791, 0.0
      %v856 = vmax.f32 %v796, 0.0
      %v857 = vmax.f32 %v799, 0.0
      %v858 = vmax.f32 %v804, 0.0
      %v859 = vmax.f32 %v807, 0.0
      %v860 = vmax.f32 %v812, 0.0
      %v861 = vmax.f32 %v815, 0.0
      %v862 = vmax.f32 %v820, 0.0
      %v863 = vmax.f32 %v823, 0.0
      %v864 = vmax.f32 %v828, 0.0
      %v865 = vmax.f32 %v831, 0.0
      %v866 = vld [vmem:[%s5] sm:$0xf]
      %v867 = vld [vmem:[%s5 + $0x4] sm:$0xf]
      %v868 = vld [vmem:[%s5 + $0x8] sm:$0xf]
      %v869 = vld [vmem:[%s5 + $0xc] sm:$0xf]
      %v870 = vld [vmem:[%s5 + $0x10] sm:$0xf]
      %v871 = vld [vmem:[%s5 + $0x14] sm:$0xf]
      %v872 = vld [vmem:[%s5 + $0x18] sm:$0xf]
      %v873 = vld [vmem:[%s5 + $0x1c] sm:$0xf]
      %v874 = vld [vmem:[%s5 + $0x20] sm:$0xf]
      %v875 = vld [vmem:[%s5 + $0x24] sm:$0xf]
      %v876 = vld [vmem:[%s5 + $0x28] sm:$0xf]
      %v877 = vld [vmem:[%s5 + $0x2c] sm:$0xf]
      %v878 = vld [vmem:[%s5 + $0x30] sm:$0xf]
      %v879 = vld [vmem:[%s5 + $0x34] sm:$0xf]
      %v880 = vld [vmem:[%s5 + $0x38] sm:$0xf]
      %v881 = vld [vmem:[%s5 + $0x3c] sm:$0xf]
      %v882 = vld [vmem:[%s6] sm:$0x1]
      %v883 = vunpack.c.l.bf16 %v882
      %v884 = vpack.c.bf16 %v835, %v834
      %v885 = vpack.c.bf16 %v837, %v836
      %v886 = vpack.c.bf16 %v839, %v838
      %v887 = vpack.c.bf16 %v841, %v840
      %v888 = vpack.c.bf16 %v843, %v842
      %v889 = vpack.c.bf16 %v845, %v844
      %v890 = vpack.c.bf16 %v847, %v846
      %v891 = vpack.c.bf16 %v849, %v848
      %v892 = vpack.c.bf16 %v851, %v850
      %v893 = vpack.c.bf16 %v853, %v852
      %v894 = vpack.c.bf16 %v855, %v854
      %v895 = vpack.c.bf16 %v857, %v856
      %v896 = vpack.c.bf16 %v859, %v858
      %v897 = vpack.c.bf16 %v861, %v860
      %v898 = vpack.c.bf16 %v863, %v862
      %v899 = vpack.c.bf16 %v865, %v864
      %v900 = vlaneseq
      %v901 = vshrl.u32 %v900, 7
      %v902 = vsub.s32 0, %v901
      %v903 = vrot.slane %v883, %v902
      %v920 = vunpack.c.l.b16 %v866
      %v921 = vunpack.c.l.b16 %v867
      %v922 = vunpack.c.l.b16 %v868
      %v923 = vunpack.c.l.b16 %v869
      %v924 = vunpack.c.l.b16 %v870
      %v925 = vunpack.c.l.b16 %v871
      %v926 = vunpack.c.l.b16 %v872
      %v927 = vunpack.c.l.b16 %v873
      %v928 = vunpack.c.l.b16 %v874
      %v929 = vunpack.c.l.b16 %v875
      %v930 = vunpack.c.l.b16 %v876
      %v931 = vunpack.c.l.b16 %v877
      %v932 = vunpack.c.l.b16 %v878
      %v933 = vunpack.c.l.b16 %v879
      %v934 = vunpack.c.l.b16 %v880
      %v935 = vunpack.c.l.b16 %v881
      %v936 = vpack.c.b16 %v921, %v920
      %v937 = vpack.c.b16 %v923, %v922
      %v938 = vpack.c.b16 %v925, %v924
      %v939 = vpack.c.b16 %v927, %v926
      %v940 = vpack.c.b16 %v929, %v928
      %v941 = vpack.c.b16 %v931, %v930
      %v942 = vpack.c.b16 %v933, %v932
      %v943 = vpack.c.b16 %v935, %v934
      %952 = vmatprep.subr.bf16.mxu0 0
      %953 = vmatpush1.bf16.msra.mxu0 %v943
      %954 = vmatprep.subr.bf16.mxu0 0
      %955 = vmatpush1.bf16.msra.mxu0 %v942
      %956 = vmatprep.subr.bf16.mxu0 0
      %957 = vmatpush1.bf16.msra.mxu0 %v941
      %958 = vmatprep.subr.bf16.mxu0 0
      %959 = vmatpush1.bf16.msra.mxu0 %v940
      %960 = vmatprep.subr.bf16.mxu0 0
      %961 = vmatpush1.bf16.msra.mxu0 %v939
      %962 = vmatprep.subr.bf16.mxu0 0
      %963 = vmatpush1.bf16.msra.mxu0 %v938
      %964 = vmatprep.subr.bf16.mxu0 0
      %965 = vmatpush1.bf16.msra.mxu0 %v937
      %966 = vmatprep.subr.bf16.mxu0 0
      %967 = vmatpush1.bf16.msra.mxu0 %v936
      %968 = vmatprep.subr.bf16.mxu0 0
      %969 = vmatpush2.bf16.msra.mxu0 0
      %970 = vmatprep.subr.bf16.mxu0 0
      %971 = vmatpush2.bf16.msra.mxu0 0
      %972 = vmatprep.subr.bf16.mxu0 0
      %973 = vmatpush2.bf16.msra.mxu0 0
      %974 = vmatprep.subr.bf16.mxu0 0
      %975 = vmatpush2.bf16.msra.mxu0 0
      %976 = vmatprep.subr.bf16.mxu0 0
      %977 = vmatpush2.bf16.msra.mxu0 0
      %978 = vmatprep.subr.bf16.mxu0 0
      %979 = vmatpush2.bf16.msra.mxu0 0
      %980 = vmatprep.subr.bf16.mxu0 0
      %981 = vmatpush2.bf16.msra.mxu0 0
      %982 = vmatprep.subr.bf16.mxu0 0
      %983 = vmatpush2.bf16.msra.mxu0 0
      %984 = vmatprep.mubr.bf16.mxu0 0
      %985 = vmatmul.mubr.bf16.gmra.mxu0 %v884
      %v986 = vpop.f32.mrf.mxu0
      %v987 = vadd.f32 %v903, %v986
      %v988 = vpop.f32.mrf.mxu0
      %v989 = vpop.f32.mrf.mxu0
      %v990 = vadd.f32 %v903, %v989
      %v991 = vpop.f32.mrf.mxu0
      %992 = vmatprep.mubr.bf16.mxu0 0
      %993 = vmatmul.mubr.bf16.gmra.mxu0 %v885
      %v994 = vpop.f32.mrf.mxu0
      %v995 = vadd.f32 %v903, %v994
      %v996 = vpop.f32.mrf.mxu0
      %v997 = vpop.f32.mrf.mxu0
      %v998 = vadd.f32 %v903, %v997
      %v999 = vpop.f32.mrf.mxu0
      %1000 = vmatprep.mubr.bf16.mxu0 0
      %1001 = vmatmul.mubr.bf16.gmra.mxu0 %v886
      %v1002 = vpop.f32.mrf.mxu0
      %v1003 = vadd.f32 %v903, %v1002
      %v1004 = vpop.f32.mrf.mxu0
      %v1005 = vpop.f32.mrf.mxu0
      %v1006 = vadd.f32 %v903, %v1005
      %v1007 = vpop.f32.mrf.mxu0
      %1008 = vmatprep.mubr.bf16.mxu0 0
      %1009 = vmatmul.mubr.bf16.gmra.mxu0 %v887
      %v1010 = vpop.f32.mrf.mxu0
      %v1011 = vadd.f32 %v903, %v1010
      %v1012 = vpop.f32.mrf.mxu0
      %v1013 = vpop.f32.mrf.mxu0
      %v1014 = vadd.f32 %v903, %v1013
      %v1015 = vpop.f32.mrf.mxu0
      %1016 = vmatprep.mubr.bf16.mxu0 0
      %1017 = vmatmul.mubr.bf16.gmra.mxu0 %v888
      %v1018 = vpop.f32.mrf.mxu0
      %v1019 = vadd.f32 %v903, %v1018
      %v1020 = vpop.f32.mrf.mxu0
      %v1021 = vpop.f32.mrf.mxu0
      %v1022 = vadd.f32 %v903, %v1021
      %v1023 = vpop.f32.mrf.mxu0
      %1024 = vmatprep.mubr.bf16.mxu0 0
      %1025 = vmatmul.mubr.bf16.gmra.mxu0 %v889
      %v1026 = vpop.f32.mrf.mxu0
      %v1027 = vadd.f32 %v903, %v1026
      %v1028 = vpop.f32.mrf.mxu0
      %v1029 = vpop.f32.mrf.mxu0
      %v1030 = vadd.f32 %v903, %v1029
      %v1031 = vpop.f32.mrf.mxu0
      %1032 = vmatprep.mubr.bf16.mxu0 0
      %1033 = vmatmul.mubr.bf16.gmra.mxu0 %v890
      %v1034 = vpop.f32.mrf.mxu0
      %v1035 = vadd.f32 %v903, %v1034
      %v1036 = vpop.f32.mrf.mxu0
      %v1037 = vpop.f32.mrf.mxu0
      %v1038 = vadd.f32 %v903, %v1037
      %v1039 = vpop.f32.mrf.mxu0
      %1040 = vmatprep.mubr.bf16.mxu0 0
      %1041 = vmatmul.mubr.bf16.gmra.mxu0 %v891
      %v1042 = vpop.f32.mrf.mxu0
      %v1043 = vadd.f32 %v903, %v1042
      %v1044 = vpop.f32.mrf.mxu0
      %v1045 = vpop.f32.mrf.mxu0
      %v1046 = vadd.f32 %v903, %v1045
      %v1047 = vpop.f32.mrf.mxu0
      %1048 = vmatprep.mubr.bf16.mxu0 0
      %1049 = vmatmul.mubr.bf16.gmra.mxu0 %v892
      %v1050 = vpop.f32.mrf.mxu0
      %v1051 = vadd.f32 %v903, %v1050
      %v1052 = vpop.f32.mrf.mxu0
      %v1053 = vpop.f32.mrf.mxu0
      %v1054 = vadd.f32 %v903, %v1053
      %v1055 = vpop.f32.mrf.mxu0
      %1056 = vmatprep.mubr.bf16.mxu0 0
      %1057 = vmatmul.mubr.bf16.gmra.mxu0 %v893
      %v1058 = vpop.f32.mrf.mxu0
      %v1059 = vadd.f32 %v903, %v1058
      %v1060 = vpop.f32.mrf.mxu0
      %v1061 = vpop.f32.mrf.mxu0
      %v1062 = vadd.f32 %v903, %v1061
      %v1063 = vpop.f32.mrf.mxu0
      %1064 = vmatprep.mubr.bf16.mxu0 0
      %1065 = vmatmul.mubr.bf16.gmra.mxu0 %v894
      %v1066 = vpop.f32.mrf.mxu0
      %v1067 = vadd.f32 %v903, %v1066
      %v1068 = vpop.f32.mrf.mxu0
      %v1069 = vpop.f32.mrf.mxu0
      %v1070 = vadd.f32 %v903, %v1069
      %v1071 = vpop.f32.mrf.mxu0
      %1072 = vmatprep.mubr.bf16.mxu0 0
      %1073 = vmatmul.mubr.bf16.gmra.mxu0 %v895
      %v1074 = vpop.f32.mrf.mxu0
      %v1075 = vadd.f32 %v903, %v1074
      %v1076 = vpop.f32.mrf.mxu0
      %v1077 = vpop.f32.mrf.mxu0
      %v1078 = vadd.f32 %v903, %v1077
      %v1079 = vpop.f32.mrf.mxu0
      %1080 = vmatprep.mubr.bf16.mxu0 0
      %1081 = vmatmul.mubr.bf16.gmra.mxu0 %v896
      %v1082 = vpop.f32.mrf.mxu0
      %v1083 = vadd.f32 %v903, %v1082
      %v1084 = vpop.f32.mrf.mxu0
      %v1085 = vpop.f32.mrf.mxu0
      %v1086 = vadd.f32 %v903, %v1085
      %v1087 = vpop.f32.mrf.mxu0
      %1088 = vmatprep.mubr.bf16.mxu0 0
      %1089 = vmatmul.mubr.bf16.gmra.mxu0 %v897
      %v1090 = vpop.f32.mrf.mxu0
      %v1091 = vadd.f32 %v903, %v1090
      %v1092 = vpop.f32.mrf.mxu0
      %v1093 = vpop.f32.mrf.mxu0
      %v1094 = vadd.f32 %v903, %v1093
      %v1095 = vpop.f32.mrf.mxu0
      %1096 = vmatprep.mubr.bf16.mxu0 0
      %1097 = vmatmul.mubr.bf16.gmra.mxu0 %v898
      %v1098 = vpop.f32.mrf.mxu0
      %v1099 = vadd.f32 %v903, %v1098
      %v1100 = vpop.f32.mrf.mxu0
      %v1101 = vpop.f32.mrf.mxu0
      %v1102 = vadd.f32 %v903, %v1101
      %v1103 = vpop.f32.mrf.mxu0
      %1104 = vmatprep.mubr.bf16.mxu0 0
      %1105 = vmatmul.mubr.bf16.gmra.mxu0 %v899
      %v1106 = vpop.f32.mrf.mxu0
      %v1107 = vadd.f32 %v903, %v1106
      %v1108 = vpop.f32.mrf.mxu0
      %v1109 = vpop.f32.mrf.mxu0
      %v1110 = vadd.f32 %v903, %v1109
      %v1111 = vpop.f32.mrf.mxu0
      %1112 = vdwg.mxu0
      %vm1113 = vcmask 64512
      %1114 = vst.msk [vmem:[%s280] sm:$0xff] %vm1113, %v987
      %1115 = vst.msk [vmem:[%s280 + $0x8] sm:$0xff] %vm1113, %v990
      %1116 = vst.msk [vmem:[%s280 + $0x10] sm:$0xff] %vm1113, %v995
      %1117 = vst.msk [vmem:[%s280 + $0x18] sm:$0xff] %vm1113, %v998
      %1118 = vst.msk [vmem:[%s280 + $0x20] sm:$0xff] %vm1113, %v1003
      %1119 = vst.msk [vmem:[%s280 + $0x28] sm:$0xff] %vm1113, %v1006
      %1120 = vst.msk [vmem:[%s280 + $0x30] sm:$0xff] %vm1113, %v1011
      %1121 = vst.msk [vmem:[%s280 + $0x38] sm:$0xff] %vm1113, %v1014
      %1122 = vst.msk [vmem:[%s280 + $0x40] sm:$0xff] %vm1113, %v1019
      %1123 = vst.msk [vmem:[%s280 + $0x48] sm:$0xff] %vm1113, %v1022
      %1124 = vst.msk [vmem:[%s280 + $0x50] sm:$0xff] %vm1113, %v1027
      %1125 = vst.msk [vmem:[%s280 + $0x58] sm:$0xff] %vm1113, %v1030
      %1126 = vst.msk [vmem:[%s280 + $0x60] sm:$0xff] %vm1113, %v1035
      %1127 = vst.msk [vmem:[%s280 + $0x68] sm:$0xff] %vm1113, %v1038
      %1128 = vst.msk [vmem:[%s280 + $0x70] sm:$0xff] %vm1113, %v1043
      %1129 = vst.msk [vmem:[%s280 + $0x78] sm:$0xff] %vm1113, %v1046
      %1130 = vst.msk [vmem:[%s280 + $0x80] sm:$0xff] %vm1113, %v1051
      %1131 = vst.msk [vmem:[%s280 + $0x88] sm:$0xff] %vm1113, %v1054
      %1132 = vst.msk [vmem:[%s280 + $0x90] sm:$0xff] %vm1113, %v1059
      %1133 = vst.msk [vmem:[%s280 + $0x98] sm:$0xff] %vm1113, %v1062
      %1134 = vst.msk [vmem:[%s280 + $0xa0] sm:$0xff] %vm1113, %v1067
      %1135 = vst.msk [vmem:[%s280 + $0xa8] sm:$0xff] %vm1113, %v1070
      %1136 = vst.msk [vmem:[%s280 + $0xb0] sm:$0xff] %vm1113, %v1075
      %1137 = vst.msk [vmem:[%s280 + $0xb8] sm:$0xff] %vm1113, %v1078
      %1138 = vst.msk [vmem:[%s280 + $0xc0] sm:$0xff] %vm1113, %v1083
      %1139 = vst.msk [vmem:[%s280 + $0xc8] sm:$0xff] %vm1113, %v1086
      %1140 = vst.msk [vmem:[%s280 + $0xd0] sm:$0xff] %vm1113, %v1091
      %1141 = vst.msk [vmem:[%s280 + $0xd8] sm:$0xff] %vm1113, %v1094
      %1142 = vst.msk [vmem:[%s280 + $0xe0] sm:$0xff] %vm1113, %v1099
      %1143 = vst.msk [vmem:[%s280 + $0xe8] sm:$0xff] %vm1113, %v1102
      %1144 = vst.msk [vmem:[%s280 + $0xf0] sm:$0xff] %vm1113, %v1107
      %1145 = vst.msk [vmem:[%s280 + $0xf8] sm:$0xff] %vm1113, %v1110
      %s1146 = smul.u32 32, %s18
      %p1147 = scmp.lt.s32.totalorder %s1146, 63
      %s1148 = scalar_select %p1147, %s1146, 63
      %s1149 = smul.addr %s1148, 8
      %s1150 = scalar_lea.vmem %s7, %s1149
      // Predicated region
      $region49: #{feed_forward_nn.1} parent=47 // pred_check
        %p1151 = pneg %p188
      $region50: #{feed_forward_nn.1} parent=47 // pred_check_branch
        %1153 = sbr.rel (%p1151) target = $region52
      $region51: #{feed_forward_nn.1} parent=47 // pred_region
        %s1154 = smul.u32 32, %s18
      $region52: #{feed_forward_nn.1} parent=47 // pred_fallthru
        _
    $region48: #{feed_forward_nn.1} parent=5 // pred_fallthru
      _
    %p1155 = scmp.le.s32.totalorder 2, %s13
    // Predicated region
    $region53: #{feed_forward_nn.1} parent=5 // pred_check
      %p1156 = pneg %p1155
    $region54: #{feed_forward_nn.1} parent=5 // pred_check_branch
      %1158 = sbr.rel (%p1156) target = $region56
    $region55: #{feed_forward_nn.1} parent=5 // pred_region
      %s1159 = ssub.s32 %s13, 2
      // Predicated region
      $region57: #{feed_forward_nn.1} parent=55 // pred_check
        %p1160 = pneg %p194
      $region58: #{feed_forward_nn.1} parent=55 // pred_check_branch
        %1162 = sbr.rel (%p1160) target = $region60
      $region59: #{feed_forward_nn.1} parent=55 // pred_region
        %s1163 = smul.u32 32, %s19
        %p1164 = scmp.lt.s32.totalorder %s1163, 63
        %s1165 = scalar_select %p1164, %s1163, 63
        %s1166 = smul.addr %s1165, 8
        %s1167 = scalar_lea.vmem %s7, %s1166
      $region60: #{feed_forward_nn.1} parent=55 // pred_fallthru
        _
    $region56: #{feed_forward_nn.1} parent=5 // pred_fallthru
      _
  $region6: #{feed_forward_nn.1} parent=0 // loop_footer
    %s17 = sadd.s32 1, %s13
  $region7: #{feed_forward_nn.1} parent=0 // loop_footer_branch
    %12 = sbr.rel target = $region3
  $region8: #{feed_forward_nn.1} parent=0 // loop_exit
    _

</llo_original>
